<compile_context>
chip_gen: v6e
topology: v6e:2x2x1
jax: 0.10.0
libtpu: 0.0.40
codegen_flags: <defaults>
</compile_context>

<pallas_src>
import functools

import jax
import jax.numpy as jnp
from jax.experimental import pallas as pl
from jax.experimental.pallas import tpu as pltpu

LANE = 128


def _largest_divisor_leq(n, cap):
    """Largest divisor of n that is <= cap (always >= 1)."""
    cap = max(1, min(n, cap))
    for g in range(cap, 0, -1):
        if n % g == 0:
            return g
    return 1


def _masked_sq_sum_kernel(x_ref, t_ref, m_ref, out_ref, *, g, p):
    """Accumulate sum(keep * (x - t)^2) for one (batch, outer) slice.

    x_ref/t_ref : (1, 1, g*p, Q, L) channel-0 voxel tiles (native dtype)
    m_ref       : (1, g, Q, L) int8 coarse-plane keep mask
    out_ref     : (1, 1, 1, L) f32 per-lane partial sums (resident across the
                  inner grid axis; summed outside the kernel)
    """
    j = pl.program_id(2)

    @pl.when(j == 0)
    def _():
        out_ref[...] = jnp.zeros_like(out_ref)

    x = x_ref[0, 0]                                   # (g*p, Q, L)
    t = t_ref[0, 0]
    diff = (x - t).astype(jnp.float32)                # bf16 sub stays bf16
    sq = diff * diff                                  # (g*p, Q, L) f32

    _, q, l = sq.shape
    # Reduce the p sub-planes of each IH-patch first (leading-axis vreg adds),
    # THEN apply the coarse-plane mask: p x fewer mask multiplies, and the
    # per-voxel mask is never materialized anywhere.
    sq = sq.reshape(g, p, q, l).sum(axis=1)           # (g, Q, L)
    sq = sq * m_ref[0].astype(jnp.float32)            # (g, Q, L)

    red = jnp.sum(sq, axis=0)                         # (Q, L)  vreg adds
    red = jnp.sum(red, axis=0, keepdims=True)         # (1, L)  sublane reduce
    out_ref[0, 0] += red


def masked_mse(inp, target, loss_mask, *, block_rows=4096):
    """Pallas implementation of Masked_MSE.forward (reduction='mean').

    block_rows: target rows of 128 voxels streamed per grid step (default 4096
    ~= 2 MiB f32 per input tile; keep <= 4096 on v5e without raising the VMEM
    limit, can be pushed to 8192 on v6e/v7x).
    """
    b, c, ih, iw, idd = inp.shape
    mb, h, w, d = loss_mask.shape
    assert mb == b, "batch mismatch between inputs and loss_mask"
    p = ih // h
    assert p >= 1 and ih == h * p and iw == w * p and idd == d * p, (
        "Masked_MSE requires IH, IW, ID to be exact multiples of h, w, d "
        "with a common patch size p = IH // h")

    plane = iw * idd
    if plane % LANE == 0:
        q_dim, l_dim = plane // LANE, LANE            # lane-dense fast path
    else:
        q_dim, l_dim = iw, idd                        # full-extent fallback (no copies)

    # Metadata-only reshapes of the FULL inputs; channel-0 slice is done by the
    # BlockSpec index_map (channel block index 0) -> no staged HBM copies.
    x5 = inp.reshape(b, c, ih, q_dim, l_dim)
    t5 = target.reshape(b, c, ih, q_dim, l_dim)

    # Coarse keep-mask expanded only over the (IW, ID) plane: (B, h, Q, L) int8
    # = vol/p bytes in HBM instead of a vol-byte per-voxel mask.
    keep = loss_mask >= 1
    m4 = jnp.broadcast_to(
        keep[:, :, :, None, :, None], (b, h, w, p, d, p)
    ).reshape(b, h, q_dim, l_dim).astype(jnp.int8)

    # IH rows per grid step: i_blk = p*g with g | h, so blocks are patch-aligned
    # and divide IH exactly (no overhang anywhere).
    target_voxels = max(block_rows, 8) * LANE
    g_cap = max(1, target_voxels // (p * plane))
    g = _largest_divisor_leq(h, g_cap)
    i_blk = p * g
    n_blocks = h // g

    # Split the IH-block axis into (outer parallel, inner reduction) so both
    # v7x TensorCores stay busy even at batch 1.
    n_outer = 2 if (n_blocks >= 2 and n_blocks % 2 == 0) else 1
    n_inner = n_blocks // n_outer

    comp_kwargs = dict(dimension_semantics=("parallel", "parallel", "arbitrary"))
    itemsize = inp.dtype.itemsize + target.dtype.itemsize
    vmem_need = 2 * (i_blk * q_dim * l_dim * itemsize + g * q_dim * l_dim) + (1 << 20)
    if vmem_need > (14 << 20):
        # Only when a single patch plane is huge; stay under v7x's 64 MiB VMEM.
        comp_kwargs["vmem_limit_bytes"] = int(min(vmem_need * 5 // 4, 64 << 20))

    kernel = functools.partial(_masked_sq_sum_kernel, g=g, p=p)

    partials = pl.pallas_call(
        kernel,
        out_shape=jax.ShapeDtypeStruct((b, n_outer, 1, l_dim), jnp.float32),
        grid_spec=pltpu.PrefetchScalarGridSpec(
            num_scalar_prefetch=0,
            grid=(b, n_outer, n_inner),
            in_specs=[
                pl.BlockSpec((1, 1, i_blk, q_dim, l_dim),
                             lambda bi, o, j: (bi, 0, o * n_inner + j, 0, 0)),
                pl.BlockSpec((1, 1, i_blk, q_dim, l_dim),
                             lambda bi, o, j: (bi, 0, o * n_inner + j, 0, 0)),
                pl.BlockSpec((1, g, q_dim, l_dim),
                             lambda bi, o, j: (bi, o * n_inner + j, 0, 0)),
            ],
            out_specs=pl.BlockSpec((1, 1, 1, l_dim),
                                   lambda bi, o, j: (bi, o, 0, 0)),
        ),
        compiler_params=pltpu.CompilerParams(**comp_kwargs),
    )(x5, t5, m4)

    sq_sum = jnp.sum(partials)
    # Denominator from the tiny coarse mask; count == 0 -> NaN (matches
    # torch.masked_select + MSELoss(mean)); do not "fix".
    count = (p ** 3) * jnp.sum(keep).astype(jnp.float32)
    return sq_sum / count


def masked_mse_ref(inp, target, loss_mask):
    """Pure-JAX reference mirroring the PyTorch forward."""
    x = inp[:, 0].astype(jnp.float32)
    t = target[:, 0].astype(jnp.float32)
    b, h, w, d = loss_mask.shape
    _, ih, iw, idd = x.shape
    p = ih // h
    x = x.reshape(b, h, p, w, p, d, p).transpose(0, 1, 3, 5, 2, 4, 6)
    t = t.reshape(b, h, p, w, p, d, p).transpose(0, 1, 3, 5, 2, 4, 6)
    m = (loss_mask >= 1)[:, :, :, :, None, None, None]
    m = jnp.broadcast_to(m, x.shape).astype(jnp.float32)
    return jnp.sum(m * (x - t) ** 2) / jnp.sum(m)


if __name__ == "__main__":
    key = jax.random.PRNGKey(0)
    k1, k2, k3, k4, k5, k6, k7, k8, k9 = jax.random.split(key, 9)

    # --- check 1: f32 volumes (B,C,IH,IW,ID)=(2,2,16,16,16), mask (2,4,4,4) ---
    B, C, IH = 2, 2, 16
    h = 4
    inp = jax.random.normal(k1, (B, C, IH, IH, IH), dtype=jnp.float32)
    tgt = jax.random.normal(k2, (B, C, IH, IH, IH), dtype=jnp.float32)
    mask = jax.random.randint(k3, (B, h, h, h), 0, 3).astype(jnp.int32)

    out = jax.block_until_ready(masked_mse(inp, tgt, mask))
    ref = masked_mse_ref(inp, tgt, mask)
    assert jnp.allclose(out, ref, rtol=1e-5, atol=1e-5), (out, ref)

    # --- check 2: bf16 inputs stay bf16 in HBM; diff in bf16, square in f32 ---
    out_bf = jax.block_until_ready(
        masked_mse(inp.astype(jnp.bfloat16), tgt.astype(jnp.bfloat16), mask))
    ref_bf = masked_mse_ref(inp.astype(jnp.bfloat16), tgt.astype(jnp.bfloat16), mask)
    assert jnp.allclose(out_bf, ref_bf, rtol=2e-2, atol=1e-3), (out_bf, ref_bf)

    # --- check 3: multi-block reduction + parallel outer split (small blocks) ---
    B2, C2, IH2, h2 = 1, 2, 32, 4
    inp2 = jax.random.normal(k4, (B2, C2, IH2, IH2, IH2), dtype=jnp.float32)
    tgt2 = jax.random.normal(k5, (B2, C2, IH2, IH2, IH2), dtype=jnp.float32)
    mask2 = jax.random.randint(k6, (B2, h2, h2, h2), 0, 3).astype(jnp.int32)

    out2 = jax.block_until_ready(masked_mse(inp2, tgt2, mask2, block_rows=16))
    ref2 = masked_mse_ref(inp2, tgt2, mask2)
    assert jnp.allclose(out2, ref2, rtol=1e-5, atol=1e-5), (out2, ref2)

    # --- check 4: IW*ID not lane-aligned -> full-extent (IW, ID) fallback ---
    B3, C3, IH3, h3 = 1, 3, 12, 3
    inp3 = jax.random.normal(k7, (B3, C3, IH3, IH3, IH3), dtype=jnp.float32)
    tgt3 = jax.random.normal(k8, (B3, C3, IH3, IH3, IH3), dtype=jnp.float32)
    mask3 = jax.random.randint(k9, (B3, h3, h3, h3), 0, 3).astype(jnp.int32)

    out3 = jax.block_until_ready(masked_mse(inp3, tgt3, mask3))
    ref3 = masked_mse_ref(inp3, tgt3, mask3)
    assert jnp.allclose(out3, ref3, rtol=1e-5, atol=1e-5), (out3, ref3)

    print("KERNEL_OK")
</pallas_src>

<mosaic_0001>
module attributes {stable_mosaic.version = 11 : i64} {
  func.func @_masked_sq_sum_kernel(%arg0: i32, %arg1: i32, %arg2: i32, %arg3: memref<1x1x16x2x128xf32, #tpu.memory_space<vmem>>, %arg4: memref<1x1x16x2x128xf32, #tpu.memory_space<vmem>>, %arg5: memref<1x4x2x128xi8, #tpu.memory_space<vmem>>, %arg6: memref<1x1x1x128xf32, #tpu.memory_space<vmem>>) attributes {dimension_semantics = [#tpu.dimension_semantics<parallel>, #tpu.dimension_semantics<parallel>, #tpu.dimension_semantics<arbitrary>], iteration_bounds = array<i64: 2, 1, 1>, scalar_prefetch = 0 : i64, scratch_operands = 0 : i64, tpu.core_type = #tpu.core_type<tc>, window_params = [{transform_indices = @transform_0, window_bounds = array<i64: 1, 1, 16, 2, 128>}, {transform_indices = @transform_1, window_bounds = array<i64: 1, 1, 16, 2, 128>}, {transform_indices = @transform_2, window_bounds = array<i64: 1, 4, 2, 128>}, {transform_indices = @transform_3, window_bounds = array<i64: 1, 1, 1, 128>}]} {
    %c0_i32 = arith.constant 0 : i32
    %0 = arith.cmpi eq, %arg2, %c0_i32 : i32
    %1 = arith.extui %0 : i1 to i32
    %c0_i32_0 = arith.constant 0 : i32
    %2 = arith.cmpi ne, %1, %c0_i32_0 : i32
    scf.if %2 {
      %cst_24 = arith.constant 0.000000e+00 : f32
      %24 = vector.broadcast %cst_24 : f32 to vector<1x1x1x128xf32>
      %c0_25 = arith.constant 0 : index
      %c0_26 = arith.constant 0 : index
      %c0_27 = arith.constant 0 : index
      %c0_28 = arith.constant 0 : index
      %25 = vector.load %arg6[%c0_25, %c0_26, %c0_27, %c0_28] : memref<1x1x1x128xf32, #tpu.memory_space<vmem>>, vector<1x1x1x128xf32>
      tpu.vector_store %arg6[%c0_25, %c0_26, %c0_27, %c0_28], %24 {strides = array<i32>} : memref<1x1x1x128xf32, #tpu.memory_space<vmem>>, vector<1x1x1x128xf32>,
    } else {
    }
    %c0 = arith.constant 0 : index
    %c0_1 = arith.constant 0 : index
    %c0_2 = arith.constant 0 : index
    %c0_3 = arith.constant 0 : index
    %c0_4 = arith.constant 0 : index
    %3 = vector.load %arg3[%c0, %c0_1, %c0_2, %c0_3, %c0_4] : memref<1x1x16x2x128xf32, #tpu.memory_space<vmem>>, vector<1x1x16x2x128xf32>
    %4 = vector.shape_cast %3 : vector<1x1x16x2x128xf32> to vector<16x2x128xf32>
    %c0_5 = arith.constant 0 : index
    %c0_6 = arith.constant 0 : index
    %c0_7 = arith.constant 0 : index
    %c0_8 = arith.constant 0 : index
    %c0_9 = arith.constant 0 : index
    %5 = vector.load %arg4[%c0_5, %c0_6, %c0_7, %c0_8, %c0_9] : memref<1x1x16x2x128xf32, #tpu.memory_space<vmem>>, vector<1x1x16x2x128xf32>
    %6 = vector.shape_cast %5 : vector<1x1x16x2x128xf32> to vector<16x2x128xf32>
    %7 = arith.subf %4, %6 : vector<16x2x128xf32>
    %8 = arith.mulf %7, %7 : vector<16x2x128xf32>
    %9 = vector.shape_cast %8 : vector<16x2x128xf32> to vector<4x4x2x128xf32>
    %cst = arith.constant dense<0.000000e+00> : vector<4x2x128xf32>
    %10 = vector.multi_reduction <add>, %9, %cst [1] : vector<4x4x2x128xf32> to vector<4x2x128xf32>
    %c0_10 = arith.constant 0 : index
    %c0_11 = arith.constant 0 : index
    %c0_12 = arith.constant 0 : index
    %c0_13 = arith.constant 0 : index
    %11 = vector.load %arg5[%c0_10, %c0_11, %c0_12, %c0_13] : memref<1x4x2x128xi8, #tpu.memory_space<vmem>>, vector<1x4x2x128xi8>
    %12 = vector.shape_cast %11 : vector<1x4x2x128xi8> to vector<4x2x128xi8>
    %13 = arith.sitofp %12 : vector<4x2x128xi8> to vector<4x2x128xf32>
    %14 = arith.mulf %10, %13 : vector<4x2x128xf32>
    %cst_14 = arith.constant dense<0.000000e+00> : vector<2x128xf32>
    %15 = vector.multi_reduction <add>, %14, %cst_14 [0] : vector<4x2x128xf32> to vector<2x128xf32>
    %cst_15 = arith.constant dense<0.000000e+00> : vector<128xf32>
    %16 = vector.multi_reduction <add>, %15, %cst_15 [0] : vector<2x128xf32> to vector<128xf32>
    %17 = vector.shape_cast %16 : vector<128xf32> to vector<1x128xf32>
    %c0_16 = arith.constant 0 : index
    %c0_17 = arith.constant 0 : index
    %c0_18 = arith.constant 0 : index
    %c0_19 = arith.constant 0 : index
    %18 = vector.load %arg6[%c0_16, %c0_17, %c0_18, %c0_19] : memref<1x1x1x128xf32, #tpu.memory_space<vmem>>, vector<1x1x1x128xf32>
    %19 = vector.shape_cast %18 : vector<1x1x1x128xf32> to vector<1x128xf32>
    %20 = arith.addf %19, %17 : vector<1x128xf32>
    %c0_20 = arith.constant 0 : index
    %c0_21 = arith.constant 0 : index
    %c0_22 = arith.constant 0 : index
    %c0_23 = arith.constant 0 : index
    %21 = vector.load %arg6[%c0_20, %c0_21, %c0_22, %c0_23] : memref<1x1x1x128xf32, #tpu.memory_space<vmem>>, vector<1x1x1x128xf32>
    %22 = vector.shape_cast %21 : vector<1x1x1x128xf32> to vector<1x128xf32>
    %23 = vector.shape_cast %20 : vector<1x128xf32> to vector<1x1x1x128xf32>
    tpu.vector_store %arg6[%c0_20, %c0_21, %c0_22, %c0_23], %23 {strides = array<i32>} : memref<1x1x1x128xf32, #tpu.memory_space<vmem>>, vector<1x1x1x128xf32>,
    return
  }
  func.func @transform_0(%arg0: i32, %arg1: i32, %arg2: i32) -> (i32, i32, i32, i32, i32) {
    %c1_i32 = arith.constant 1 : i32
    %0 = arith.muli %arg1, %c1_i32 : i32
    %1 = arith.addi %0, %arg2 : i32
    %c0_i32 = arith.constant 0 : i32
    %c0_i32_0 = arith.constant 0 : i32
    %c0_i32_1 = arith.constant 0 : i32
    %c0_i32_2 = arith.constant 0 : i32
    return %arg0, %c0_i32, %1, %c0_i32_0, %c0_i32_1 : i32, i32, i32, i32, i32
  }
  func.func @transform_1(%arg0: i32, %arg1: i32, %arg2: i32) -> (i32, i32, i32, i32, i32) {
    %c1_i32 = arith.constant 1 : i32
    %0 = arith.muli %arg1, %c1_i32 : i32
    %1 = arith.addi %0, %arg2 : i32
    %c0_i32 = arith.constant 0 : i32
    %c0_i32_0 = arith.constant 0 : i32
    %c0_i32_1 = arith.constant 0 : i32
    %c0_i32_2 = arith.constant 0 : i32
    return %arg0, %c0_i32, %1, %c0_i32_0, %c0_i32_1 : i32, i32, i32, i32, i32
  }
  func.func @transform_2(%arg0: i32, %arg1: i32, %arg2: i32) -> (i32, i32, i32, i32) {
    %c1_i32 = arith.constant 1 : i32
    %0 = arith.muli %arg1, %c1_i32 : i32
    %1 = arith.addi %0, %arg2 : i32
    %c0_i32 = arith.constant 0 : i32
    %c0_i32_0 = arith.constant 0 : i32
    %c0_i32_1 = arith.constant 0 : i32
    return %arg0, %1, %c0_i32, %c0_i32_0 : i32, i32, i32, i32
  }
  func.func @transform_3(%arg0: i32, %arg1: i32, %arg2: i32) -> (i32, i32, i32, i32) {
    %c0_i32 = arith.constant 0 : i32
    %c0_i32_0 = arith.constant 0 : i32
    %c0_i32_1 = arith.constant 0 : i32
    return %arg0, %arg1, %c0_i32, %c0_i32_0 : i32, i32, i32, i32
  }
}

</mosaic_0001>

<llo_original>
// kernel: tpu_custom_call.1
$region0: #{tpu_custom_call.1}
  #allocation0 [shape = 'u32[]', space=smem, size = 0x4, offset = 0x4, fixed_abs, tag = 'smem constant byte address 0x4 - core index']
  #allocation1 [shape = 'u32[144,128]{1,0:T(1,128)}', space=vmem, size = 0x12000, scoped, tag = 'internal scratch']
  %s0 = inlined_call_operand.hbm [shape: f32[2,2,16,2,128], index: 0, kind: input, shape index: {}]
  %s1 = inlined_call_operand.hbm [shape: f32[2,2,16,2,128], index: 1, kind: input, shape index: {}]
  %s2 = inlined_call_operand.vmem [shape: s8[2,4,2,128], index: 2, kind: input, shape index: {}]
  %s3 = inlined_call_operand.hbm [shape: f32[2,1,1,128], index: 3, kind: output, shape index: {}]
  %s4 = sld [smem:[#allocation0]]
  $region57: #{tpu_custom_call.1} parent=0
    _
  %s6 = ssub.s32 1, %s4
  %s7 = scalar_select 0, %s6, %s4
  $region1: #{tpu_custom_call.1} parent=0
    #allocation2 [shape = 'u8[32768]{0}', space=vmem, size = 0x8000, scoped, tag = 'input window, operand 0']
    #allocation3 [shape = 's32[2]{0}', space=sflag, size = 0x8, scoped, tag = 'scoped memory for tpu_custom_call.1']
    #allocation4 [shape = 's32[2]{0}', space=sflag, size = 0x8, scoped, tag = 'scoped memory for tpu_custom_call.1']
    #allocation5 [shape = 'u8[32768]{0}', space=vmem, size = 0x8000, scoped, tag = 'input window, operand 1']
    #allocation6 [shape = 's32[2]{0}', space=sflag, size = 0x8, scoped, tag = 'scoped memory for tpu_custom_call.1']
    #allocation7 [shape = 'u8[1024]{0}', space=vmem, size = 0x400, scoped, tag = 'output window, operand 0']
    %8 = vsyncpa [#allocation3], 0
    %s9 = scalar_lea.sflag [#allocation3], 1
    %10 = vsyncpa %s9, 0
    %11 = vsyncpa [#allocation6], 0
    %s12 = scalar_lea.sflag [#allocation6], 1
    %13 = vsyncpa %s12, 0
    %14 = vsyncpa [#allocation4], 0
    %s15 = scalar_lea.sflag [#allocation4], 1
    %16 = vsyncpa %s15, 0
    loop: start=0, step=1, limit=4
    $region2: #{tpu_custom_call.1} parent=1 // loop_pre_header
      _
    $region3: #{tpu_custom_call.1} parent=1 // loop_header
      %s18 = sphi 0, %s22
      %p19 = scmp.ge.s32.totalorder %s18, 4
      %s25 = sphi 0, %s44
      %s26 = sphi 0, %s40
      %s27 = sphi 0, %s36
      %s28 = sphi 0, %s25
      %s29 = sphi 0, %s26
      %s30 = sphi 0, %s27
      %s31 = sphi 0, %s28
      %s32 = sphi 0, %s29
      %s33 = sphi 0, %s30
      %s51 = sphi 0, %s53
      %s54 = sphi 0, %s51
      %s55 = sphi 0, %s54
      %s71 = sphi 0, %s55
      %s81 = sphi 0, %s83
      %s84 = sphi 0, %s81
      %s85 = sphi 0, %s84
      %s101 = sphi 0, %s85
      %s111 = sphi 0, %s113
      %s114 = sphi 0, %s111
      %s115 = sphi 0, %s114
      %s131 = sphi 0, %s115
      %s139 = sphi 0, %s141
      %s142 = sphi 0, %s139
      %s143 = sphi 0, %s142
      %s159 = sphi 0, %s143
    $region4: #{tpu_custom_call.1} parent=1 // loop_header_branch
      %21 = sbr.rel (%p19) target = $region8
    $region5: #{tpu_custom_call.1} parent=1 // loop_body
      %s23 = ssub.s32 %s18, 1
      %s24 = ssub.s32 %s18, 2
      %s34 = sadd.s32 1, %s27
      %p35 = scmp.ge.s32.totalorder %s34, 1
      %s36 = scalar_select %p35, 0, %s34
      %s37 = sadd.s32 1, %s26
      %s38 = scalar_select %p35, %s37, %s26
      %p39 = scmp.ge.s32.totalorder %s38, 1
      %s40 = scalar_select %p39, 0, %s38
      %s41 = sadd.s32 1, %s25
      %s42 = scalar_select %p39, %s41, %s25
      %p43 = scmp.ge.s32.totalorder %s42, 2
      %s44 = scalar_select %p43, 0, %s42
      %s45 = sadd.s32 %s26, %s27
      %s46 = sadd.s32 %s40, %s36
      %s47 = ssub.s32 %s25, %s44
      %s48 = ssub.s32 %s45, %s46
      %s49 = sor.u32 %s47, %s48
      %p50 = scmp.eq.s32.totalorder %s49, 0
      %s52 = sadd.s32 %s51, 1
      %s53 = scalar_select %p50, %s51, %s52
      %p56 = pneg %p50
      %p57 = scmp.eq.s32.totalorder %s18, 1
      %p58 = por %p56, %p57
      %p59 = scmp.ne.s32.totalorder %s51, %s54
      %p60 = scmp.eq.s32.totalorder %s18, 0
      %p61 = por %p59, %p60
      %p62 = scmp.ne.s32.totalorder %s51, %s54
      %p63 = scmp.eq.s32.totalorder %s23, 1
      %p64 = por %p62, %p63
      %p65 = scmp.ne.s32.totalorder %s54, %s55
      %p66 = scmp.eq.s32.totalorder %s23, 0
      %p67 = por %p65, %p66
      %p68 = scmp.ne.s32.totalorder %s54, %s55
      %p69 = scmp.eq.s32.totalorder %s24, 1
      %p70 = por %p68, %p69
      %p72 = scmp.ne.s32.totalorder %s55, %s71
      %p73 = scmp.eq.s32.totalorder %s24, 0
      %p74 = por %p72, %p73
      %s75 = sadd.s32 %s26, %s27
      %s76 = sadd.s32 %s40, %s36
      %s77 = ssub.s32 %s25, %s44
      %s78 = ssub.s32 %s75, %s76
      %s79 = sor.u32 %s77, %s78
      %p80 = scmp.eq.s32.totalorder %s79, 0
      %s82 = sadd.s32 %s81, 1
      %s83 = scalar_select %p80, %s81, %s82
      %p86 = pneg %p80
      %p87 = scmp.eq.s32.totalorder %s18, 1
      %p88 = por %p86, %p87
      %p89 = scmp.ne.s32.totalorder %s81, %s84
      %p90 = scmp.eq.s32.totalorder %s18, 0
      %p91 = por %p89, %p90
      %p92 = scmp.ne.s32.totalorder %s81, %s84
      %p93 = scmp.eq.s32.totalorder %s23, 1
      %p94 = por %p92, %p93
      %p95 = scmp.ne.s32.totalorder %s84, %s85
      %p96 = scmp.eq.s32.totalorder %s23, 0
      %p97 = por %p95, %p96
      %p98 = scmp.ne.s32.totalorder %s84, %s85
      %p99 = scmp.eq.s32.totalorder %s24, 1
      %p100 = por %p98, %p99
      %p102 = scmp.ne.s32.totalorder %s85, %s101
      %p103 = scmp.eq.s32.totalorder %s24, 0
      %p104 = por %p102, %p103
      %s105 = sadd.s32 %s26, %s27
      %s106 = sadd.s32 %s40, %s36
      %s107 = ssub.s32 %s25, %s44
      %s108 = ssub.s32 %s105, %s106
      %s109 = sor.u32 %s107, %s108
      %p110 = scmp.eq.s32.totalorder %s109, 0
      %s112 = sadd.s32 %s111, 1
      %s113 = scalar_select %p110, %s111, %s112
      %p116 = pneg %p110
      %p117 = scmp.eq.s32.totalorder %s18, 1
      %p118 = por %p116, %p117
      %p119 = scmp.ne.s32.totalorder %s111, %s114
      %p120 = scmp.eq.s32.totalorder %s18, 0
      %p121 = por %p119, %p120
      %p122 = scmp.ne.s32.totalorder %s111, %s114
      %p123 = scmp.eq.s32.totalorder %s23, 1
      %p124 = por %p122, %p123
      %p125 = scmp.ne.s32.totalorder %s114, %s115
      %p126 = scmp.eq.s32.totalorder %s23, 0
      %p127 = por %p125, %p126
      %p128 = scmp.ne.s32.totalorder %s114, %s115
      %p129 = scmp.eq.s32.totalorder %s24, 1
      %p130 = por %p128, %p129
      %p132 = scmp.ne.s32.totalorder %s115, %s131
      %p133 = scmp.eq.s32.totalorder %s24, 0
      %p134 = por %p132, %p133
      %s135 = ssub.s32 %s25, %s44
      %s136 = ssub.s32 %s26, %s40
      %s137 = sor.u32 %s135, %s136
      %p138 = scmp.eq.s32.totalorder %s137, 0
      %s140 = sadd.s32 %s139, 1
      %s141 = scalar_select %p138, %s139, %s140
      %p144 = pneg %p138
      %p145 = scmp.eq.s32.totalorder %s18, 1
      %p146 = por %p144, %p145
      %p147 = scmp.ne.s32.totalorder %s139, %s142
      %p148 = scmp.eq.s32.totalorder %s18, 0
      %p149 = por %p147, %p148
      %p150 = scmp.ne.s32.totalorder %s139, %s142
      %p151 = scmp.eq.s32.totalorder %s23, 1
      %p152 = por %p150, %p151
      %p153 = scmp.ne.s32.totalorder %s142, %s143
      %p154 = scmp.eq.s32.totalorder %s23, 0
      %p155 = por %p153, %p154
      %p156 = scmp.ne.s32.totalorder %s142, %s143
      %p157 = scmp.eq.s32.totalorder %s24, 1
      %p158 = por %p156, %p157
      %p160 = scmp.ne.s32.totalorder %s143, %s159
      %p161 = scmp.eq.s32.totalorder %s24, 0
      %p162 = por %p160, %p161
      %p163 = scmp.le.s32.totalorder 1, %s18
      %p164 = scmp.lt.s32.totalorder %s18, 3
      %p165 = pnand %p163, %p164
      %p166 = pneg %p165
      // Predicated region
      $region9: #{tpu_custom_call.1} parent=5 // pred_check
        _
      $region10: #{tpu_custom_call.1} parent=5 // pred_check_branch
        %168 = sbr.rel (%p165) target = $region12
      $region11: #{tpu_custom_call.1} parent=5 // pred_region
        %s169 = ssub.s32 %s18, 1
      $region12: #{tpu_custom_call.1} parent=5 // pred_fallthru
        _
      %p170 = scmp.lt.s32.totalorder %s18, 2
      // Predicated region
      $region13: #{tpu_custom_call.1} parent=5 // pred_check
        %p171 = pneg %p170
      $region14: #{tpu_custom_call.1} parent=5 // pred_check_branch
        %173 = sbr.rel (%p171) target = $region16
      $region15: #{tpu_custom_call.1} parent=5 // pred_region
        // Predicated region
        $region17: #{tpu_custom_call.1} parent=15 // pred_check
          %p174 = pneg %p61
        $region18: #{tpu_custom_call.1} parent=15 // pred_check_branch
          %176 = sbr.rel (%p174) target = $region20
        $region19: #{tpu_custom_call.1} parent=15 // pred_region
          %s177 = sand.u32 %s51, 1
          %s178 = scalar_lea.sflag [#allocation3], %s177
          %s179 = sand.u32 %s51, 1
          %s180 = smul.addr %s179, 32
          %s181 = scalar_lea.vmem [#allocation2], %s180
          %s182 = sadd.s32 %s26, %s27
          %s183 = smul.u32 16, %s182
          %s185 = ssub.s32 512, 512
          %186 = vsyncadd %s178, %s185
          %s187 = smul.addr %s25, 32
          %s188 = sadd.s32 %s183, %s187
          %s189 = smul.addr %s188, 32
          %s190 = scalar_lea.hbm %s0, %s189
          %s191 = sshll.u32 %s181, 4
          %s192 = int_to_ptr.vmem [resolvable:$true] %s191
          %197 = dma.hbm_to_vmem [thread:$0]  %s190, 512, %s192, %s178, 32, 32, 2
        $region20: #{tpu_custom_call.1} parent=15 // pred_fallthru
          _
        // Predicated region
        $region21: #{tpu_custom_call.1} parent=15 // pred_check
          %p198 = pneg %p91
        $region22: #{tpu_custom_call.1} parent=15 // pred_check_branch
          %200 = sbr.rel (%p198) target = $region24
        $region23: #{tpu_custom_call.1} parent=15 // pred_region
          %s201 = sand.u32 %s81, 1
          %s202 = scalar_lea.sflag [#allocation6], %s201
          %s203 = sand.u32 %s81, 1
          %s204 = smul.addr %s203, 32
          %s205 = scalar_lea.vmem [#allocation5], %s204
          %s206 = sadd.s32 %s26, %s27
          %s207 = smul.u32 16, %s206
          %s209 = ssub.s32 512, 512
          %210 = vsyncadd %s202, %s209
          %s211 = smul.addr %s25, 32
          %s212 = sadd.s32 %s207, %s211
          %s213 = smul.addr %s212, 32
          %s214 = scalar_lea.hbm %s1, %s213
          %s215 = sshll.u32 %s205, 4
          %s216 = int_to_ptr.vmem [resolvable:$true] %s215
          %221 = dma.hbm_to_vmem [thread:$0]  %s214, 512, %s216, %s202, 32, 32, 2
        $region24: #{tpu_custom_call.1} parent=15 // pred_fallthru
          _
        // Predicated region
        $region25: #{tpu_custom_call.1} parent=15 // pred_check
          %p222 = pneg %p121
        $region26: #{tpu_custom_call.1} parent=15 // pred_check_branch
          %224 = sbr.rel (%p222) target = $region28
        $region27: #{tpu_custom_call.1} parent=15 // pred_region
          %s225 = sadd.s32 %s26, %s27
          %s226 = smul.u32 4, %s225
          %p227 = scmp.lt.s32.totalorder %s25, 1
          %s228 = scalar_select %p227, %s25, 1
          %p229 = scmp.lt.s32.totalorder %s226, 3
          %s230 = scalar_select %p229, %s226, 3
          %s231 = smul.addr %s228, 4
          %s232 = sadd.s32 %s230, %s231
          %s233 = scalar_lea.vmem %s2, %s232
          %s234 = sadd.s32 %s26, %s27
          %s235 = smul.u32 4, %s234
        $region28: #{tpu_custom_call.1} parent=15 // pred_fallthru
          _
      $region16: #{tpu_custom_call.1} parent=5 // pred_fallthru
        _
      %p236 = scmp.le.s32.totalorder 1, %s18
      %p237 = scmp.lt.s32.totalorder %s18, 3
      %p238 = pnand %p236, %p237
      %p239 = pneg %p238
      // Predicated region
      $region29: #{tpu_custom_call.1} parent=5 // pred_check
        _
      $region30: #{tpu_custom_call.1} parent=5 // pred_check_branch
        %241 = sbr.rel (%p238) target = $region32
      $region31: #{tpu_custom_call.1} parent=5 // pred_region
        %s242 = ssub.s32 %s18, 1
        %s243 = sand.u32 %s54, 1
        %s244 = scalar_lea.sflag [#allocation3], %s243
        %s245 = sand.u32 %s54, 1
        %s246 = smul.addr %s245, 32
        %s247 = scalar_lea.vmem [#allocation2], %s246
        // Predicated region
        $region33: #{tpu_custom_call.1} parent=31 // pred_check
          %p248 = pneg %p67
        $region34: #{tpu_custom_call.1} parent=31 // pred_check_branch
          %250 = sbr.rel (%p248) target = $region36
        $region35: #{tpu_custom_call.1} parent=31 // pred_region
          %251 = dma.done %s244, 512
        $region36: #{tpu_custom_call.1} parent=31 // pred_fallthru
          _
        %s252 = sand.u32 %s84, 1
        %s253 = scalar_lea.sflag [#allocation6], %s252
        %s254 = sand.u32 %s84, 1
        %s255 = smul.addr %s254, 32
        %s256 = scalar_lea.vmem [#allocation5], %s255
        // Predicated region
        $region37: #{tpu_custom_call.1} parent=31 // pred_check
          %p257 = pneg %p97
        $region38: #{tpu_custom_call.1} parent=31 // pred_check_branch
          %259 = sbr.rel (%p257) target = $region40
        $region39: #{tpu_custom_call.1} parent=31 // pred_region
          %260 = dma.done %s253, 512
        $region40: #{tpu_custom_call.1} parent=31 // pred_fallthru
          _
        %s261 = sand.u32 %s54, 1
        %s262 = scalar_lea.sflag [#allocation3], %s261
        %s263 = sand.u32 %s54, 1
        %s264 = smul.addr %s263, 32
        %s265 = scalar_lea.vmem [#allocation2], %s264
        %p266 = pneg %p67
        %p267 = pneg %p64
        %s268 = sand.u32 %s84, 1
        %s269 = scalar_lea.sflag [#allocation6], %s268
        %s270 = sand.u32 %s84, 1
        %s271 = smul.addr %s270, 32
        %s272 = scalar_lea.vmem [#allocation5], %s271
        %p273 = pneg %p97
        %p274 = pneg %p94
        %s275 = sadd.s32 %s29, %s30
        %s276 = smul.u32 4, %s275
        %p277 = scmp.lt.s32.totalorder %s28, 1
        %s278 = scalar_select %p277, %s28, 1
        %p279 = scmp.lt.s32.totalorder %s276, 3
        %s280 = scalar_select %p279, %s276, 3
        %s281 = smul.addr %s278, 4
        %s282 = sadd.s32 %s280, %s281
        %s283 = scalar_lea.vmem %s2, %s282
        %p284 = pneg %p127
        %p285 = pneg %p124
        %p286 = pneg %p155
        %p287 = pneg %p152
        %s288 = sand.u32 %s142, 1
        %s289 = scalar_lea.sflag [#allocation4], %s288
        %s290 = sand.u32 %s142, 1
        %s291 = scalar_lea.vmem [#allocation7], %s290
        %s292 = sadd.s32 %s29, %s30
        %s293 = smul.u32 16, %s292
        %s294 = sadd.s32 %s29, %s30
        %s295 = smul.u32 16, %s294
        %s296 = sadd.s32 %s29, %s30
        %s297 = smul.u32 4, %s296
        %p298 = scmp.lt.s32.totalorder %s28, 1
        %s299 = scalar_select %p298, %s28, 1
        %p300 = scmp.lt.s32.totalorder %s297, 3
        %s301 = scalar_select %p300, %s297, 3
        %s302 = smul.addr %s299, 4
        %s303 = sadd.s32 %s301, %s302
        %s304 = scalar_lea.vmem %s2, %s303
        %s305 = sadd.s32 %s29, %s30
        %s306 = smul.u32 4, %s305
        %p307 = scmp.eq.s32.totalorder %s30, 0
        // Predicated region
        $region41: #{tpu_custom_call.1} parent=31 // pred_check
          %p308 = pneg %p307
        $region42: #{tpu_custom_call.1} parent=31 // pred_check_branch
          %310 = sbr.rel (%p308) target = $region44
        $region43: #{tpu_custom_call.1} parent=31 // pred_region
          %311 = vst [vmem:[%s291] sm:$0x1] 0.0
        $region44: #{tpu_custom_call.1} parent=31 // pred_fallthru
          _
        %v312 = vld [vmem:[%s247] sm:$0x3]
        %v313 = vld [vmem:[%s247 + $0x2] sm:$0x3]
        %v314 = vld [vmem:[%s247 + $0x4] sm:$0x3]
        %v315 = vld [vmem:[%s247 + $0x6] sm:$0x3]
        %v316 = vld [vmem:[%s247 + $0x8] sm:$0x3]
        %v317 = vld [vmem:[%s247 + $0xa] sm:$0x3]
        %v318 = vld [vmem:[%s247 + $0xc] sm:$0x3]
        %v319 = vld [vmem:[%s247 + $0xe] sm:$0x3]
        %v320 = vld [vmem:[%s247 + $0x10] sm:$0x3]
        %v321 = vld [vmem:[%s247 + $0x12] sm:$0x3]
        %v322 = vld [vmem:[%s247 + $0x14] sm:$0x3]
        %v323 = vld [vmem:[%s247 + $0x16] sm:$0x3]
        %v324 = vld [vmem:[%s247 + $0x18] sm:$0x3]
        %v325 = vld [vmem:[%s247 + $0x1a] sm:$0x3]
        %v326 = vld [vmem:[%s247 + $0x1c] sm:$0x3]
        %v327 = vld [vmem:[%s247 + $0x1e] sm:$0x3]
        %v328 = vld [vmem:[%s256] sm:$0x3]
        %v329 = vld [vmem:[%s256 + $0x2] sm:$0x3]
        %v330 = vld [vmem:[%s256 + $0x4] sm:$0x3]
        %v331 = vld [vmem:[%s256 + $0x6] sm:$0x3]
        %v332 = vld [vmem:[%s256 + $0x8] sm:$0x3]
        %v333 = vld [vmem:[%s256 + $0xa] sm:$0x3]
        %v334 = vld [vmem:[%s256 + $0xc] sm:$0x3]
        %v335 = vld [vmem:[%s256 + $0xe] sm:$0x3]
        %v336 = vld [vmem:[%s256 + $0x10] sm:$0x3]
        %v337 = vld [vmem:[%s256 + $0x12] sm:$0x3]
        %v338 = vld [vmem:[%s256 + $0x14] sm:$0x3]
        %v339 = vld [vmem:[%s256 + $0x16] sm:$0x3]
        %v340 = vld [vmem:[%s256 + $0x18] sm:$0x3]
        %v341 = vld [vmem:[%s256 + $0x1a] sm:$0x3]
        %v342 = vld [vmem:[%s256 + $0x1c] sm:$0x3]
        %v343 = vld [vmem:[%s256 + $0x1e] sm:$0x3]
        %v344 = vsub.f32 %v312, %v328
        %v345 = vsub.f32 %v313, %v329
        %v346 = vsub.f32 %v314, %v330
        %v347 = vsub.f32 %v315, %v331
        %v348 = vsub.f32 %v316, %v332
        %v349 = vsub.f32 %v317, %v333
        %v350 = vsub.f32 %v318, %v334
        %v351 = vsub.f32 %v319, %v335
        %v352 = vsub.f32 %v320, %v336
        %v353 = vsub.f32 %v321, %v337
        %v354 = vsub.f32 %v322, %v338
        %v355 = vsub.f32 %v323, %v339
        %v356 = vsub.f32 %v324, %v340
        %v357 = vsub.f32 %v325, %v341
        %v358 = vsub.f32 %v326, %v342
        %v359 = vsub.f32 %v327, %v343
        %v360 = vmul.f32 %v344, %v344
        %v361 = vmul.f32 %v345, %v345
        %v362 = vmul.f32 %v346, %v346
        %v363 = vmul.f32 %v347, %v347
        %v364 = vmul.f32 %v348, %v348
        %v365 = vmul.f32 %v349, %v349
        %v366 = vmul.f32 %v350, %v350
        %v367 = vmul.f32 %v351, %v351
        %v368 = vmul.f32 %v352, %v352
        %v369 = vmul.f32 %v353, %v353
        %v370 = vmul.f32 %v354, %v354
        %v371 = vmul.f32 %v355, %v355
        %v372 = vmul.f32 %v356, %v356
        %v373 = vmul.f32 %v357, %v357
        %v374 = vmul.f32 %v358, %v358
        %v375 = vmul.f32 %v359, %v359
        %vm376 = vcmask 1041408
        %v377 = vsel %vm376, %v360, 0.0
        %v378 = vsel %vm376, %v361, 0.0
        %v379 = vadd.f32 %v377, %v378
        %v380 = vsel %vm376, %v362, 0.0
        %v381 = vadd.f32 %v379, %v380
        %v382 = vsel %vm376, %v363, 0.0
        %v383 = vadd.f32 %v381, %v382
        %v384 = vsel %vm376, %v364, 0.0
        %v385 = vsel %vm376, %v365, 0.0
        %v386 = vadd.f32 %v384, %v385
        %v387 = vsel %vm376, %v366, 0.0
        %v388 = vadd.f32 %v386, %v387
        %v389 = vsel %vm376, %v367, 0.0
        %v390 = vadd.f32 %v388, %v389
        %v391 = vsel %vm376, %v368, 0.0
        %v392 = vsel %vm376, %v369, 0.0
        %v393 = vadd.f32 %v391, %v392
        %v394 = vsel %vm376, %v370, 0.0
        %v395 = vadd.f32 %v393, %v394
        %v396 = vsel %vm376, %v371, 0.0
        %v397 = vadd.f32 %v395, %v396
        %v398 = vsel %vm376, %v372, 0.0
        %v399 = vsel %vm376, %v373, 0.0
        %v400 = vadd.f32 %v398, %v399
        %v401 = vsel %vm376, %v374, 0.0
        %v402 = vadd.f32 %v400, %v401
        %v403 = vsel %vm376, %v375, 0.0
        %v404 = vadd.f32 %v402, %v403
        %v405 = vld [vmem:[%s304] sm:$0x1]
        %v406 = vld [vmem:[%s304 + $0x1] sm:$0x1]
        %v407 = vld [vmem:[%s304 + $0x2] sm:$0x1]
        %v408 = vld [vmem:[%s304 + $0x3] sm:$0x1]
        %v409 = vunpack.c.0.s8 %v405
        %v410 = vunpack.c.0.s8 %v406
        %v411 = vunpack.c.0.s8 %v407
        %v412 = vunpack.c.0.s8 %v408
        %v413 = vcvt.s32.f32 %v409
        %v414 = vcvt.s32.f32 %v410
        %v415 = vcvt.s32.f32 %v411
        %v416 = vcvt.s32.f32 %v412
        %v417 = vmul.f32 %v383, %v413
        %v418 = vmul.f32 %v390, %v414
        %v419 = vmul.f32 %v397, %v415
        %v420 = vmul.f32 %v404, %v416
        %v421 = vsel %vm376, %v417, 0.0
        %v422 = vsel %vm376, %v418, 0.0
        %v423 = vadd.f32 %v421, %v422
        %v424 = vsel %vm376, %v419, 0.0
        %v425 = vadd.f32 %v423, %v424
        %v426 = vsel %vm376, %v420, 0.0
        %v427 = vadd.f32 %v425, %v426
        %v428 = vsel %vm376, %v427, 0.0
        %v429 = vrot.slane %v428, 4
        %v430 = vadd.f32 %v428, %v429
        %v431 = vrot.slane %v430, 2
        %v432 = vadd.f32 %v430, %v431
        %v433 = vrot.slane %v432, 1
        %v434 = vadd.f32 %v432, %v433
        %v435 = vld [vmem:[%s291] sm:$0x1]
        %v436 = vadd.f32 %v435, %v434
        %437 = vst [vmem:[%s291] sm:$0x1] %v436
        %s438 = sand.u32 %s142, 1
        %s439 = scalar_lea.sflag [#allocation4], %s438
        %s440 = sand.u32 %s142, 1
        %s441 = scalar_lea.vmem [#allocation7], %s440
        // Predicated region
        $region45: #{tpu_custom_call.1} parent=31 // pred_check
          %p442 = pneg %p152
        $region46: #{tpu_custom_call.1} parent=31 // pred_check_branch
          %444 = sbr.rel (%p442) target = $region48
        $region47: #{tpu_custom_call.1} parent=31 // pred_region
          %s446 = ssub.s32 16, 16
          %447 = vsyncadd %s439, %s446
          %s448 = sadd.s32 %s29, %s28
          %s449 = smul.addr %s448, 16
          %s450 = scalar_lea.hbm %s3, %s449
          %s452 = sshll.u32 %s441, 4
          %s453 = int_to_ptr.vmem [resolvable:$true] %s452
          %455 = dma.vmem_to_hbm [thread:$0]  %s453, 16, %s450, %s439
        $region48: #{tpu_custom_call.1} parent=31 // pred_fallthru
          _
      $region32: #{tpu_custom_call.1} parent=5 // pred_fallthru
        _
      %p456 = scmp.le.s32.totalorder 2, %s18
      // Predicated region
      $region49: #{tpu_custom_call.1} parent=5 // pred_check
        %p457 = pneg %p456
      $region50: #{tpu_custom_call.1} parent=5 // pred_check_branch
        %459 = sbr.rel (%p457) target = $region52
      $region51: #{tpu_custom_call.1} parent=5 // pred_region
        %s460 = ssub.s32 %s18, 2
        // Predicated region
        $region53: #{tpu_custom_call.1} parent=51 // pred_check
          %p461 = pneg %p158
        $region54: #{tpu_custom_call.1} parent=51 // pred_check_branch
          %463 = sbr.rel (%p461) target = $region56
        $region55: #{tpu_custom_call.1} parent=51 // pred_region
          %s464 = sand.u32 %s143, 1
          %s465 = scalar_lea.sflag [#allocation4], %s464
          %s466 = sand.u32 %s143, 1
          %s467 = scalar_lea.vmem [#allocation7], %s466
          %468 = dma.done %s465, 16
        $region56: #{tpu_custom_call.1} parent=51 // pred_fallthru
          _
      $region52: #{tpu_custom_call.1} parent=5 // pred_fallthru
        _
    $region6: #{tpu_custom_call.1} parent=1 // loop_footer
      %s22 = sadd.s32 1, %s18
    $region7: #{tpu_custom_call.1} parent=1 // loop_footer_branch
      %17 = sbr.rel target = $region3
    $region8: #{tpu_custom_call.1} parent=1 // loop_exit
      _
    %469 = vsyncpa [#allocation3], 1
    %s470 = scalar_lea.sflag [#allocation3], 1
    %471 = vsyncpa %s470, 1
    %472 = vsyncpa [#allocation6], 1
    %s473 = scalar_lea.sflag [#allocation6], 1
    %474 = vsyncpa %s473, 1
    %475 = vsyncpa [#allocation4], 1
    %s476 = scalar_lea.sflag [#allocation4], 1
    %477 = vsyncpa %s476, 1

</llo_original>
